<compile_context>
chip_gen: v5e
topology: v5e:2x2
jax: 0.10.0
libtpu: 0.0.40
codegen_flags: <defaults>
</compile_context>

<pallas_src>
import functools

import jax
import jax.numpy as jnp
import numpy as np
from jax.experimental import pallas as pl
from jax.experimental.pallas import tpu as pltpu


# --------------------------- Pallas kernel ----------------------------------

def _ese_kernel(x_ref, w_ref, b_ref, o_ref, *, inv_hw, add_maxpool, gate):
    """One batch element: x_ref [C, HW]; w_ref [C, C]; b_ref [C, 1]."""
    x = x_ref[...]                                               # [C, HW]
    se = jnp.sum(x, axis=-1, keepdims=True) * inv_hw             # mean over spatial
    if add_maxpool:
        se = 0.5 * se + 0.5 * jnp.max(x, axis=-1, keepdims=True)
    # 1x1 conv on the pooled vector == mat-vec: [Cout,Cin] @ [Cin,1] + b
    fc = jnp.dot(w_ref[...], se, preferred_element_type=jnp.float32) + b_ref[...]
    if gate == "hard_sigmoid":
        g = jnp.clip(fc * (1.0 / 6.0) + 0.5, 0.0, 1.0)           # relu6(x+3)/6
    else:  # 'sigmoid'
        g = jax.nn.sigmoid(fc)
    o_ref[...] = x * g                                           # column bcast over lanes


# --------------------------- wrapper -----------------------------------------

def effective_se_attention(x_nchw, w, b, *, add_maxpool=False, gate="hard_sigmoid"):
    N, C, H, W = x_nchw.shape
    HW = H * W
    x3 = jnp.asarray(x_nchw, jnp.float32).reshape(N, C, HW)   # pure reshape (NCHW contiguous)
    w2 = jnp.asarray(w, jnp.float32).reshape(C, C)            # [Cout,Cin,1,1] -> [Cout,Cin]
    b2 = jnp.asarray(b, jnp.float32).reshape(C, 1)

    kern = functools.partial(_ese_kernel, inv_hw=1.0 / HW,
                             add_maxpool=add_maxpool, gate=gate)
    out = pl.pallas_call(
        kern,
        grid=(N,),
        in_specs=[
            pl.BlockSpec((None, C, HW), lambda n: (n, 0, 0)),   # one batch slab [C, HW]
            pl.BlockSpec((C, C), lambda n: (0, 0)),             # fc weight (grid-invariant)
            pl.BlockSpec((C, 1), lambda n: (0, 0)),             # fc bias   (grid-invariant)
        ],
        out_specs=pl.BlockSpec((None, C, HW), lambda n: (n, 0, 0)),
        out_shape=jax.ShapeDtypeStruct((N, C, HW), jnp.float32),
        compiler_params=pltpu.CompilerParams(
            dimension_semantics=("parallel",)),                 # batch across TCs (v7x)
    )(x3, w2, b2)
    return out.reshape(N, C, H, W)


# --------------------------- pure-JAX reference ------------------------------

def _ref_forward(x, w, b, *, add_maxpool=False, gate="hard_sigmoid"):
    C = x.shape[1]
    se = jnp.mean(x, axis=(2, 3), keepdims=True)
    if add_maxpool:
        se = 0.5 * se + 0.5 * jnp.max(x, axis=(2, 3), keepdims=True)
    fc = jnp.einsum("nchw,oc->nohw", se, w.reshape(C, C)) + b[None, :, None, None]
    if gate == "hard_sigmoid":
        g = jnp.clip(fc / 6.0 + 0.5, 0.0, 1.0)
    else:
        g = jax.nn.sigmoid(fc)
    return x * g


# --------------------------- main --------------------------------------------

if __name__ == "__main__":
    key = jax.random.PRNGKey(0)
    k_x, k_w, k_b = jax.random.split(key, 3)

    N, C, H, W = 2, 32, 16, 16
    x = jax.random.normal(k_x, (N, C, H, W), jnp.float32)            # NCHW, like PyTorch
    w = jax.random.normal(k_w, (C, C, 1, 1), jnp.float32) / np.sqrt(C)
    b = 0.1 * jax.random.normal(k_b, (C,), jnp.float32)

    for amp in (False, True):                                        # default + add_maxpool
        out = jax.block_until_ready(effective_se_attention(x, w, b, add_maxpool=amp))
        assert out.shape == (N, C, H, W), out.shape
        ref = jax.block_until_ready(_ref_forward(x, w, b, add_maxpool=amp))
        np.testing.assert_allclose(np.asarray(out), np.asarray(ref),
                                   rtol=1e-3, atol=1e-3)

    print("KERNEL_OK")
</pallas_src>

<mosaic_0001>
module attributes {stable_mosaic.version = 11 : i64} {
  func.func @_ese_kernel(%arg0: i32, %arg1: memref<1x32x256xf32, #tpu.memory_space<vmem>>, %arg2: memref<32x32xf32, #tpu.memory_space<vmem>>, %arg3: memref<32x1xf32, #tpu.memory_space<vmem>>, %arg4: memref<1x32x256xf32, #tpu.memory_space<vmem>>) attributes {dimension_semantics = [#tpu.dimension_semantics<parallel>], iteration_bounds = array<i64: 2>, scalar_prefetch = 0 : i64, scratch_operands = 0 : i64, tpu.core_type = #tpu.core_type<tc>, window_params = [{transform_indices = @transform_0, window_bounds = array<i64: 1, 32, 256>}, {pipeline_mode = #tpu.pipeline_mode<synchronous>, transform_indices = @transform_1, window_bounds = array<i64: 32, 32>}, {pipeline_mode = #tpu.pipeline_mode<synchronous>, transform_indices = @transform_2, window_bounds = array<i64: 32, 1>}, {transform_indices = @transform_3, window_bounds = array<i64: 1, 32, 256>}]} {
    %c0 = arith.constant 0 : index
    %c0_0 = arith.constant 0 : index
    %c0_1 = arith.constant 0 : index
    %0 = vector.load %arg1[%c0, %c0_0, %c0_1] : memref<1x32x256xf32, #tpu.memory_space<vmem>>, vector<1x32x256xf32>
    %1 = vector.shape_cast %0 : vector<1x32x256xf32> to vector<32x256xf32>
    %cst = arith.constant dense<0.000000e+00> : vector<32xf32>
    %2 = vector.multi_reduction <add>, %1, %cst [1] : vector<32x256xf32> to vector<32xf32>
    %3 = vector.shape_cast %2 : vector<32xf32> to vector<32x1xf32>
    %cst_2 = arith.constant 3.906250e-03 : f32
    %4 = vector.broadcast %cst_2 : f32 to vector<32x1xf32>
    %5 = arith.mulf %3, %4 : vector<32x1xf32>
    %c0_3 = arith.constant 0 : index
    %c0_4 = arith.constant 0 : index
    %6 = vector.load %arg2[%c0_3, %c0_4] : memref<32x32xf32, #tpu.memory_space<vmem>>, vector<32x32xf32>
    %cst_5 = arith.constant dense<0.000000e+00> : vector<32x1xf32>
    %7 = tpu.matmul %6, %5, %cst_5 {dimension_numbers = #tpu.dot_dimension_numbers<[1], [0], [0], [1], [0, 0, 1, 1], [], []>} : vector<32x32xf32>, vector<32x1xf32>, vector<32x1xf32> -> vector<32x1xf32>
    %c0_6 = arith.constant 0 : index
    %c0_7 = arith.constant 0 : index
    %8 = vector.load %arg3[%c0_6, %c0_7] : memref<32x1xf32, #tpu.memory_space<vmem>>, vector<32x1xf32>
    %9 = arith.addf %7, %8 : vector<32x1xf32>
    %cst_8 = arith.constant 0.166666672 : f32
    %10 = vector.broadcast %cst_8 : f32 to vector<32x1xf32>
    %11 = arith.mulf %9, %10 : vector<32x1xf32>
    %cst_9 = arith.constant 5.000000e-01 : f32
    %12 = vector.broadcast %cst_9 : f32 to vector<32x1xf32>
    %13 = arith.addf %11, %12 : vector<32x1xf32>
    %cst_10 = arith.constant 0.000000e+00 : f32
    %cst_11 = arith.constant 1.000000e+00 : f32
    %14 = vector.broadcast %cst_10 : f32 to vector<32x1xf32>
    %15 = arith.maximumf %14, %13 : vector<32x1xf32>
    %16 = vector.broadcast %cst_11 : f32 to vector<32x1xf32>
    %17 = arith.minimumf %16, %15 : vector<32x1xf32>
    %18 = vector.broadcast %17 : vector<32x1xf32> to vector<32x256xf32>
    %19 = arith.mulf %1, %18 : vector<32x256xf32>
    %c0_12 = arith.constant 0 : index
    %c0_13 = arith.constant 0 : index
    %c0_14 = arith.constant 0 : index
    %20 = vector.load %arg4[%c0_12, %c0_13, %c0_14] : memref<1x32x256xf32, #tpu.memory_space<vmem>>, vector<1x32x256xf32>
    %21 = vector.shape_cast %20 : vector<1x32x256xf32> to vector<32x256xf32>
    %22 = vector.shape_cast %19 : vector<32x256xf32> to vector<1x32x256xf32>
    tpu.vector_store %arg4[%c0_12, %c0_13, %c0_14], %22 {strides = array<i32>} : memref<1x32x256xf32, #tpu.memory_space<vmem>>, vector<1x32x256xf32>,
    return
  }
  func.func @transform_0(%arg0: i32) -> (i32, i32, i32) {
    %c0_i32 = arith.constant 0 : i32
    %c0_i32_0 = arith.constant 0 : i32
    %c0_i32_1 = arith.constant 0 : i32
    return %arg0, %c0_i32, %c0_i32_0 : i32, i32, i32
  }
  func.func @transform_1(%arg0: i32) -> (i32, i32) {
    %c0_i32 = arith.constant 0 : i32
    %c0_i32_0 = arith.constant 0 : i32
    %c0_i32_1 = arith.constant 0 : i32
    return %c0_i32, %c0_i32_0 : i32, i32
  }
  func.func @transform_2(%arg0: i32) -> (i32, i32) {
    %c0_i32 = arith.constant 0 : i32
    %c0_i32_0 = arith.constant 0 : i32
    %c0_i32_1 = arith.constant 0 : i32
    return %c0_i32, %c0_i32_0 : i32, i32
  }
  func.func @transform_3(%arg0: i32) -> (i32, i32, i32) {
    %c0_i32 = arith.constant 0 : i32
    %c0_i32_0 = arith.constant 0 : i32
    %c0_i32_1 = arith.constant 0 : i32
    return %arg0, %c0_i32, %c0_i32_0 : i32, i32, i32
  }
}

</mosaic_0001>

<llo_original>
// kernel: tpu_custom_call.1
$region0: #{tpu_custom_call.1}
  #allocation0 [shape = 'u32[]', space=smem, size = 0x4, offset = 0x4, fixed_abs, tag = 'smem constant byte address 0x4 - core index']
  #allocation1 [shape = 'u32[72,128]{1,0:T(1,128)}', space=vmem, size = 0x9000, scoped, tag = 'internal scratch']
  %s0 = inlined_call_operand.hbm [shape: f32[2,32,256], index: 0, kind: input, shape index: {}]
  %s1 = inlined_call_operand.vmem [shape: f32[32,32], index: 1, kind: input, shape index: {}]
  %s2 = inlined_call_operand.vmem [shape: f32[32,1], index: 2, kind: input, shape index: {}]
  %s3 = inlined_call_operand.hbm [shape: f32[2,32,256], index: 3, kind: output, shape index: {}]
  %s4 = sld [smem:[#allocation0]]
  $region49: #{tpu_custom_call.1} parent=0
    _
  %s6 = ssub.s32 1, %s4
  %s7 = scalar_select 0, %s6, %s4
  $region1: #{tpu_custom_call.1} parent=0
    #allocation2 [shape = 'u8[65536]{0}', space=vmem, size = 0x10000, scoped, tag = 'input window, operand 0']
    #allocation3 [shape = 's32[2]{0}', space=sflag, size = 0x8, scoped, tag = 'scoped memory for tpu_custom_call.1']
    #allocation4 [shape = 's32[2]{0}', space=sflag, size = 0x8, scoped, tag = 'scoped memory for tpu_custom_call.1']
    #allocation5 [shape = 'u8[65536]{0}', space=vmem, size = 0x10000, scoped, tag = 'output window, operand 0']
    %8 = vsyncpa [#allocation3], 0
    %s9 = scalar_lea.sflag [#allocation3], 1
    %10 = vsyncpa %s9, 0
    %11 = vsyncpa [#allocation4], 0
    %s12 = scalar_lea.sflag [#allocation4], 1
    %13 = vsyncpa %s12, 0
    loop: start=0, step=1, limit=4
    $region2: #{tpu_custom_call.1} parent=1 // loop_pre_header
      _
    $region3: #{tpu_custom_call.1} parent=1 // loop_header
      %s15 = sphi 0, %s19
      %p16 = scmp.ge.s32.totalorder %s15, 4
      %s25 = sphi 0, %s27
      %s28 = sphi 0, %s25
      %s29 = sphi 0, %s28
      %s45 = sphi 0, %s29
      %s49 = sphi 0, %s49
      %s51 = sphi 0, %s49
      %s52 = sphi 0, %s51
      %s66 = sphi 0, %s52
      %s70 = sphi 0, %s70
      %s72 = sphi 0, %s70
      %s73 = sphi 0, %s72
      %s87 = sphi 0, %s73
      %s93 = sphi 0, %s95
      %s96 = sphi 0, %s93
      %s97 = sphi 0, %s96
      %s113 = sphi 0, %s97
    $region4: #{tpu_custom_call.1} parent=1 // loop_header_branch
      %18 = sbr.rel (%p16) target = $region8
    $region5: #{tpu_custom_call.1} parent=1 // loop_body
      %s20 = ssub.s32 %s15, 1
      %s21 = ssub.s32 %s15, 2
      %s22 = sadd.s32 %s15, 1
      %s23 = ssub.s32 %s15, %s22
      %p24 = scmp.eq.s32.totalorder %s23, 0
      %s26 = sadd.s32 %s25, 1
      %s27 = scalar_select %p24, %s25, %s26
      %p30 = pneg %p24
      %p31 = scmp.eq.s32.totalorder %s15, 1
      %p32 = por %p30, %p31
      %p33 = scmp.ne.s32.totalorder %s25, %s28
      %p34 = scmp.eq.s32.totalorder %s15, 0
      %p35 = por %p33, %p34
      %p36 = scmp.ne.s32.totalorder %s25, %s28
      %p37 = scmp.eq.s32.totalorder %s20, 1
      %p38 = por %p36, %p37
      %p39 = scmp.ne.s32.totalorder %s28, %s29
      %p40 = scmp.eq.s32.totalorder %s20, 0
      %p41 = por %p39, %p40
      %p42 = scmp.ne.s32.totalorder %s28, %s29
      %p43 = scmp.eq.s32.totalorder %s21, 1
      %p44 = por %p42, %p43
      %p46 = scmp.ne.s32.totalorder %s29, %s45
      %p47 = scmp.eq.s32.totalorder %s21, 0
      %p48 = por %p46, %p47
      %s50 = sadd.s32 %s49, 1
      %p53 = scmp.eq.s32.totalorder %s15, 1
      %p54 = scmp.ne.s32.totalorder %s49, %s51
      %p55 = scmp.eq.s32.totalorder %s15, 0
      %p56 = por %p54, %p55
      %p57 = scmp.ne.s32.totalorder %s49, %s51
      %p58 = scmp.eq.s32.totalorder %s20, 1
      %p59 = por %p57, %p58
      %p60 = scmp.ne.s32.totalorder %s51, %s52
      %p61 = scmp.eq.s32.totalorder %s20, 0
      %p62 = por %p60, %p61
      %p63 = scmp.ne.s32.totalorder %s51, %s52
      %p64 = scmp.eq.s32.totalorder %s21, 1
      %p65 = por %p63, %p64
      %p67 = scmp.ne.s32.totalorder %s52, %s66
      %p68 = scmp.eq.s32.totalorder %s21, 0
      %p69 = por %p67, %p68
      %s71 = sadd.s32 %s70, 1
      %p74 = scmp.eq.s32.totalorder %s15, 1
      %p75 = scmp.ne.s32.totalorder %s70, %s72
      %p76 = scmp.eq.s32.totalorder %s15, 0
      %p77 = por %p75, %p76
      %p78 = scmp.ne.s32.totalorder %s70, %s72
      %p79 = scmp.eq.s32.totalorder %s20, 1
      %p80 = por %p78, %p79
      %p81 = scmp.ne.s32.totalorder %s72, %s73
      %p82 = scmp.eq.s32.totalorder %s20, 0
      %p83 = por %p81, %p82
      %p84 = scmp.ne.s32.totalorder %s72, %s73
      %p85 = scmp.eq.s32.totalorder %s21, 1
      %p86 = por %p84, %p85
      %p88 = scmp.ne.s32.totalorder %s73, %s87
      %p89 = scmp.eq.s32.totalorder %s21, 0
      %p90 = por %p88, %p89
      %s91 = ssub.s32 %s15, %s22
      %p92 = scmp.eq.s32.totalorder %s91, 0
      %s94 = sadd.s32 %s93, 1
      %s95 = scalar_select %p92, %s93, %s94
      %p98 = pneg %p92
      %p99 = scmp.eq.s32.totalorder %s15, 1
      %p100 = por %p98, %p99
      %p101 = scmp.ne.s32.totalorder %s93, %s96
      %p102 = scmp.eq.s32.totalorder %s15, 0
      %p103 = por %p101, %p102
      %p104 = scmp.ne.s32.totalorder %s93, %s96
      %p105 = scmp.eq.s32.totalorder %s20, 1
      %p106 = por %p104, %p105
      %p107 = scmp.ne.s32.totalorder %s96, %s97
      %p108 = scmp.eq.s32.totalorder %s20, 0
      %p109 = por %p107, %p108
      %p110 = scmp.ne.s32.totalorder %s96, %s97
      %p111 = scmp.eq.s32.totalorder %s21, 1
      %p112 = por %p110, %p111
      %p114 = scmp.ne.s32.totalorder %s97, %s113
      %p115 = scmp.eq.s32.totalorder %s21, 0
      %p116 = por %p114, %p115
      %p117 = scmp.le.s32.totalorder 1, %s15
      %p118 = scmp.lt.s32.totalorder %s15, 3
      %p119 = pnand %p117, %p118
      %p120 = pneg %p119
      // Predicated region
      $region9: #{tpu_custom_call.1} parent=5 // pred_check
        _
      $region10: #{tpu_custom_call.1} parent=5 // pred_check_branch
        %122 = sbr.rel (%p119) target = $region12
      $region11: #{tpu_custom_call.1} parent=5 // pred_region
        %s123 = ssub.s32 %s15, 1
        // Predicated region
        $region13: #{tpu_custom_call.1} parent=11 // pred_check
          %p124 = pneg %p62
        $region14: #{tpu_custom_call.1} parent=11 // pred_check_branch
          %126 = sbr.rel (%p124) target = $region16
        $region15: #{tpu_custom_call.1} parent=11 // pred_region
          _
        $region16: #{tpu_custom_call.1} parent=11 // pred_fallthru
          _
        // Predicated region
        $region17: #{tpu_custom_call.1} parent=11 // pred_check
          %p127 = pneg %p83
        $region18: #{tpu_custom_call.1} parent=11 // pred_check_branch
          %129 = sbr.rel (%p127) target = $region20
        $region19: #{tpu_custom_call.1} parent=11 // pred_region
          _
        $region20: #{tpu_custom_call.1} parent=11 // pred_fallthru
          _
      $region12: #{tpu_custom_call.1} parent=5 // pred_fallthru
        _
      %p130 = scmp.lt.s32.totalorder %s15, 2
      // Predicated region
      $region21: #{tpu_custom_call.1} parent=5 // pred_check
        %p131 = pneg %p130
      $region22: #{tpu_custom_call.1} parent=5 // pred_check_branch
        %133 = sbr.rel (%p131) target = $region24
      $region23: #{tpu_custom_call.1} parent=5 // pred_region
        // Predicated region
        $region25: #{tpu_custom_call.1} parent=23 // pred_check
          %p134 = pneg %p35
        $region26: #{tpu_custom_call.1} parent=23 // pred_check_branch
          %136 = sbr.rel (%p134) target = $region28
        $region27: #{tpu_custom_call.1} parent=23 // pred_region
          %s137 = sand.u32 %s25, 1
          %s138 = scalar_lea.sflag [#allocation3], %s137
          %s139 = sand.u32 %s25, 1
          %s140 = smul.addr %s139, 64
          %s141 = scalar_lea.vmem [#allocation2], %s140
          %143 = vsyncadd %s138, 0
          %s144 = smul.addr %s15, 8
          %s145 = smul.addr %s144, 8
          %s146 = scalar_lea.hbm %s0, %s145
          %s147 = sshll.u32 %s146, 4
          %s148 = int_to_ptr.hbm [resolvable:$true] %s147
          %s149 = sshll.u32 %s141, 4
          %s150 = int_to_ptr.vmem [resolvable:$true] %s149
          %155 = dma.hbm_to_vmem [thread:$0]  %s148, 1024, %s150, %s138, 256, 256, 16
        $region28: #{tpu_custom_call.1} parent=23 // pred_fallthru
          _
      $region24: #{tpu_custom_call.1} parent=5 // pred_fallthru
        _
      %p156 = scmp.le.s32.totalorder 1, %s15
      %p157 = scmp.lt.s32.totalorder %s15, 3
      %p158 = pnand %p156, %p157
      %p159 = pneg %p158
      // Predicated region
      $region29: #{tpu_custom_call.1} parent=5 // pred_check
        _
      $region30: #{tpu_custom_call.1} parent=5 // pred_check_branch
        %161 = sbr.rel (%p158) target = $region32
      $region31: #{tpu_custom_call.1} parent=5 // pred_region
        %s162 = ssub.s32 %s15, 1
        %s163 = sand.u32 %s28, 1
        %s164 = scalar_lea.sflag [#allocation3], %s163
        %s165 = sand.u32 %s28, 1
        %s166 = smul.addr %s165, 64
        %s167 = scalar_lea.vmem [#allocation2], %s166
        // Predicated region
        $region33: #{tpu_custom_call.1} parent=31 // pred_check
          %p168 = pneg %p41
        $region34: #{tpu_custom_call.1} parent=31 // pred_check_branch
          %170 = sbr.rel (%p168) target = $region36
        $region35: #{tpu_custom_call.1} parent=31 // pred_region
          %172 = dma.done %s164, 1024
        $region36: #{tpu_custom_call.1} parent=31 // pred_fallthru
          _
        %s173 = sand.u32 %s28, 1
        %s174 = scalar_lea.sflag [#allocation3], %s173
        %s175 = sand.u32 %s28, 1
        %s176 = smul.addr %s175, 64
        %s177 = scalar_lea.vmem [#allocation2], %s176
        %p178 = pneg %p41
        %p179 = pneg %p38
        %p180 = pneg %p62
        %p181 = pneg %p59
        %p182 = pneg %p83
        %p183 = pneg %p80
        %p184 = pneg %p109
        %p185 = pneg %p106
        %s186 = sand.u32 %s96, 1
        %s187 = scalar_lea.sflag [#allocation4], %s186
        %s188 = sand.u32 %s96, 1
        %s189 = smul.addr %s188, 64
        %s190 = scalar_lea.vmem [#allocation5], %s189
        %v191 = vld [vmem:[%s167] sm:$0xff]
        %v192 = vld [vmem:[%s167 + $0x8] sm:$0xff]
        %v193 = vld [vmem:[%s167 + $0x10] sm:$0xff]
        %v194 = vld [vmem:[%s167 + $0x18] sm:$0xff]
        %v195 = vld [vmem:[%s167 + $0x20] sm:$0xff]
        %v196 = vld [vmem:[%s167 + $0x28] sm:$0xff]
        %v197 = vld [vmem:[%s167 + $0x30] sm:$0xff]
        %v198 = vld [vmem:[%s167 + $0x38] sm:$0xff]
        %v199 = vadd.f32 %v191, %v192
        %200 = vadd.xlane.f32.xlu0 %v199
        %v201 = vpop.xlane.xlu0 %200
        %v202 = vadd.f32 %v193, %v194
        %203 = vadd.xlane.f32.xlu0 %v202
        %v204 = vpop.xlane.xlu0 %203
        %v205 = vadd.f32 %v195, %v196
        %206 = vadd.xlane.f32.xlu0 %v205
        %v207 = vpop.xlane.xlu0 %206
        %v208 = vadd.f32 %v197, %v198
        %209 = vadd.xlane.f32.xlu0 %v208
        %v210 = vpop.xlane.xlu0 %209
        %v211 = vmul.f32 %v201, 0.00390625
        %v212 = vmul.f32 %v204, 0.00390625
        %v213 = vmul.f32 %v207, 0.00390625
        %v214 = vmul.f32 %v210, 0.00390625
        %v215 = vld [vmem:[%s1] sm:$0xff]
        %v216 = vld [vmem:[%s1 + $0x8] sm:$0xff]
        %v217 = vld [vmem:[%s1 + $0x10] sm:$0xff]
        %v218 = vld [vmem:[%s1 + $0x18] sm:$0xff]
        %v219 = vld [vmem:[%s2] sm:$0xff]
        %v220 = vld [vmem:[%s2 + $0x8] sm:$0xff]
        %v221 = vld [vmem:[%s2 + $0x10] sm:$0xff]
        %v222 = vld [vmem:[%s2 + $0x18] sm:$0xff]
        %vm223 = vcmask 261120
        %v225 = vsel %vm223, %v215, 0
        %v228 = vsel %vm223, %v216, 0
        %v231 = vsel %vm223, %v217, 0
        %v234 = vsel %vm223, %v218, 0
        %236 = vmatpush.msra.mxu0 0.0
        %237 = vmatpush.msra.mxu0 0.0
        %238 = vmatpush.msra.mxu0 0.0
        %239 = vmatpush.msra.mxu0 0.0
        %240 = vmatpush.msra.mxu0 0.0
        %241 = vmatpush.msra.mxu0 0.0
        %242 = vmatpush.msra.mxu0 0.0
        %243 = vmatpush.msra.mxu0 0.0
        %244 = vmatpush.msra.mxu0 0.0
        %245 = vmatpush.msra.mxu0 0.0
        %246 = vmatpush.msra.mxu0 0.0
        %247 = vmatpush.msra.mxu0 0.0
        %248 = vmatpush.msra.mxu0 %v214
        %249 = vmatpush.msra.mxu0 %v213
        %250 = vmatpush.msra.mxu0 %v212
        %251 = vmatpush.msra.mxu0 %v211
        %252 = vmatmul.f32.gmra.mxu0 %v225
        %v253 = vpop.f32.mrf.mxu0
        %v254 = vadd.f32 %v219, %v253
        %255 = vmatmul.f32.gmra.mxu0 %v228
        %v256 = vpop.f32.mrf.mxu0
        %v257 = vadd.f32 %v220, %v256
        %258 = vmatmul.f32.gmra.mxu0 %v231
        %v259 = vpop.f32.mrf.mxu0
        %v260 = vadd.f32 %v221, %v259
        %261 = vmatmul.f32.gmra.mxu0 %v234
        %v262 = vpop.f32.mrf.mxu0
        %v263 = vadd.f32 %v222, %v262
        %264 = vdwg.mxu0
        %v265 = vmul.f32 %v254, 0.16666667
        %v266 = vmul.f32 %v257, 0.16666667
        %v267 = vmul.f32 %v260, 0.16666667
        %v268 = vmul.f32 %v263, 0.16666667
        %v269 = vadd.f32 %v265, 0.5
        %v270 = vadd.f32 %v266, 0.5
        %v271 = vadd.f32 %v267, 0.5
        %v272 = vadd.f32 %v268, 0.5
        %v273 = vmax.f32 %v269, 0.0
        %v274 = vmax.f32 %v270, 0.0
        %v275 = vmax.f32 %v271, 0.0
        %v276 = vmax.f32 %v272, 0.0
        %v277 = vmin.f32 %v273, 1.0
        %v278 = vmin.f32 %v274, 1.0
        %v279 = vmin.f32 %v275, 1.0
        %v280 = vmin.f32 %v276, 1.0
        %282 = vset.pattern.permute.xlu0 0
        %283 = vperm.xlu0 %282, %v277
        %v284 = vpop.permute.xlu0 %283
        %287 = vset.pattern.permute.xlu0 0
        %288 = vperm.xlu0 %287, %v278
        %v289 = vpop.permute.xlu0 %288
        %292 = vset.pattern.permute.xlu0 0
        %293 = vperm.xlu0 %292, %v279
        %v294 = vpop.permute.xlu0 %293
        %297 = vset.pattern.permute.xlu0 0
        %298 = vperm.xlu0 %297, %v280
        %v299 = vpop.permute.xlu0 %298
        %v301 = vmul.f32 %v191, %v284
        %v302 = vmul.f32 %v192, %v284
        %v303 = vmul.f32 %v193, %v289
        %v304 = vmul.f32 %v194, %v289
        %v305 = vmul.f32 %v195, %v294
        %v306 = vmul.f32 %v196, %v294
        %v307 = vmul.f32 %v197, %v299
        %v308 = vmul.f32 %v198, %v299
        %309 = vst [vmem:[%s190] sm:$0xff] %v301
        %310 = vst [vmem:[%s190 + $0x8] sm:$0xff] %v302
        %311 = vst [vmem:[%s190 + $0x10] sm:$0xff] %v303
        %312 = vst [vmem:[%s190 + $0x18] sm:$0xff] %v304
        %313 = vst [vmem:[%s190 + $0x20] sm:$0xff] %v305
        %314 = vst [vmem:[%s190 + $0x28] sm:$0xff] %v306
        %315 = vst [vmem:[%s190 + $0x30] sm:$0xff] %v307
        %316 = vst [vmem:[%s190 + $0x38] sm:$0xff] %v308
        %s317 = sand.u32 %s96, 1
        %s318 = scalar_lea.sflag [#allocation4], %s317
        %s319 = sand.u32 %s96, 1
        %s320 = smul.addr %s319, 64
        %s321 = scalar_lea.vmem [#allocation5], %s320
        // Predicated region
        $region37: #{tpu_custom_call.1} parent=31 // pred_check
          %p322 = pneg %p106
        $region38: #{tpu_custom_call.1} parent=31 // pred_check_branch
          %324 = sbr.rel (%p322) target = $region40
        $region39: #{tpu_custom_call.1} parent=31 // pred_region
          %326 = vsyncadd %s318, 0
          %s327 = smul.addr %s20, 8
          %s328 = smul.addr %s327, 8
          %s329 = scalar_lea.hbm %s3, %s328
          %s330 = sshll.u32 %s321, 4
          %s331 = int_to_ptr.vmem [resolvable:$true] %s330
          %s332 = sshll.u32 %s329, 4
          %s333 = int_to_ptr.hbm [resolvable:$true] %s332
          %338 = dma.vmem_to_hbm [thread:$0]  %s331, 1024, %s333, %s318, 256, 256, 16
        $region40: #{tpu_custom_call.1} parent=31 // pred_fallthru
          _
      $region32: #{tpu_custom_call.1} parent=5 // pred_fallthru
        _
      %p339 = scmp.le.s32.totalorder 2, %s15
      // Predicated region
      $region41: #{tpu_custom_call.1} parent=5 // pred_check
        %p340 = pneg %p339
      $region42: #{tpu_custom_call.1} parent=5 // pred_check_branch
        %342 = sbr.rel (%p340) target = $region44
      $region43: #{tpu_custom_call.1} parent=5 // pred_region
        %s343 = ssub.s32 %s15, 2
        // Predicated region
        $region45: #{tpu_custom_call.1} parent=43 // pred_check
          %p344 = pneg %p112
        $region46: #{tpu_custom_call.1} parent=43 // pred_check_branch
          %346 = sbr.rel (%p344) target = $region48
        $region47: #{tpu_custom_call.1} parent=43 // pred_region
          %s347 = sand.u32 %s97, 1
          %s348 = scalar_lea.sflag [#allocation4], %s347
          %s349 = sand.u32 %s97, 1
          %s350 = smul.addr %s349, 64
          %s351 = scalar_lea.vmem [#allocation5], %s350
          %353 = dma.done %s348, 1024
        $region48: #{tpu_custom_call.1} parent=43 // pred_fallthru
          _
      $region44: #{tpu_custom_call.1} parent=5 // pred_fallthru
        _
    $region6: #{tpu_custom_call.1} parent=1 // loop_footer
      %s19 = sadd.s32 1, %s15
    $region7: #{tpu_custom_call.1} parent=1 // loop_footer_branch
      %14 = sbr.rel target = $region3
    $region8: #{tpu_custom_call.1} parent=1 // loop_exit
      _
    %354 = vsyncpa [#allocation3], 1
    %s355 = scalar_lea.sflag [#allocation3], 1
    %356 = vsyncpa %s355, 1
    %357 = vsyncpa [#allocation4], 1
    %s358 = scalar_lea.sflag [#allocation4], 1
    %359 = vsyncpa %s358, 1

</llo_original>
